<compile_context>
chip_gen: v6e
topology: v6e:2x2x1
jax: 0.10.0
libtpu: 0.0.40
codegen_flags: <defaults>
</compile_context>

<pallas_src>
import functools

import jax
import jax.numpy as jnp
from jax import lax
from jax.experimental import pallas as pl
from jax.experimental.pallas import tpu as pltpu


_MXU_DTYPE = jnp.bfloat16   # conv matmul operand dtype (f32 accumulation)


# ----------------------------------------------------------------------------
# Kernel (operates on (C, H*W) values: channels on sublanes, pixels on lanes)
# ----------------------------------------------------------------------------
def _stack_encoder_kernel(x_ref, w1_ref, w2_ref, masks_ref, sel_ref,
                          y_ref, ys_ref, *, H, W):
    """Fused conv1+relu -> conv2+relu -> 2x2 max-pool for one batch element."""
    HW = H * W

    x = x_ref[0].astype(jnp.float32)          # (cin_p, HW)
    masks = masks_ref[...]                    # (9, HW) f32, grid-invariant

    def conv3x3_relu(a, w_ref):
        """'Same' 3x3 conv + ReLU as one im2col matmul.

        a:     (C, HW) f32 activations
        w_ref: (Cout, 9*C) bf16 weights, contraction axis ordered (ky, kx, c)
        """
        rows = []
        for ky in range(3):
            for kx in range(3):
                delta = (ky - 1) * W + (kx - 1)
                # s[c, h*W+w] = a[c, (h+ky-1)*W + (w+kx-1)]  (zero-padded)
                s = a if delta == 0 else pltpu.roll(a, (-delta) % HW, axis=1)
                if (ky, kx) != (1, 1):
                    s = s * masks[ky * 3 + kx]        # precomputed 0/1 mask
                rows.append(s)
        patch = jnp.concatenate(rows, axis=0).astype(_MXU_DTYPE)   # (9C, HW)
        out = jnp.dot(w_ref[...], patch,
                      preferred_element_type=jnp.float32)          # (Cout, HW)
        return jnp.maximum(out, 0.0)

    h1 = conv3x3_relu(x, w1_ref)                 # (Cout, HW) f32
    y = conv3x3_relu(h1, w2_ref)                 # (Cout, HW) f32
    y_ref[0] = y.astype(y_ref.dtype)

    # --- fused 2x2 / stride-2 max-pool epilogue -----------------------------
    # Pairwise max along rows (+W) then columns (+1) on the XLU; roll
    # wrap-around only touches odd-h / last-column lanes, which the even-index
    # compaction discards (H, W asserted even in the wrapper).
    m = jnp.maximum(y, pltpu.roll(y, (-W) % HW, axis=1))
    m = jnp.maximum(m, pltpu.roll(m, HW - 1, axis=1))
    # Exact f32 0/1 selection matmul; sel is precomputed in the wrapper,
    # padded to a lane-dense (multiple of 128) column count.
    pooled = jnp.dot(m, sel_ref[...], preferred_element_type=jnp.float32)
    ys_ref[0] = pooled.astype(ys_ref.dtype)


# ----------------------------------------------------------------------------
# Wrapper
# ----------------------------------------------------------------------------
@jax.jit
def stack_encoder_forward(x_nchw, w1_hwio, w2_hwio):
    """StackEncoder.forward (bn=False, BatchNorm=False).

    x_nchw:  (N, Cin, H, W)
    w1_hwio: (3, 3, Cin, Cout)   conv1 weight (HWIO, bias-free)
    w2_hwio: (3, 3, Cout, Cout)  conv2 weight (HWIO, bias-free)
    Returns (y, y_small) in NCHW.
    """
    N, Cin, H, W = x_nchw.shape
    Cout = w1_hwio.shape[-1]
    assert H % 2 == 0 and W % 2 == 0, "2x2/stride-2 pool needs even H, W"
    assert Cout % 8 == 0, "Cout must be a multiple of 8 (sublane tiling)"
    HW = H * W
    Ho, Wo = H // 2, W // 2
    HoWo = Ho * Wo
    pool_cols = ((HoWo + 127) // 128) * 128   # lane-dense pooled store

    # Free layout plumbing: reshape of contiguous NCHW is a bitcast.
    x_flat = x_nchw.reshape(N, Cin, HW)

    # Pad input channels to a multiple of 8 so in-kernel concats are aligned.
    cin_p = ((Cin + 7) // 8) * 8
    if cin_p != Cin:
        x_flat = jnp.pad(x_flat, ((0, 0), (0, cin_p - Cin), (0, 0)))
        w1_hwio = jnp.pad(w1_hwio, ((0, 0), (0, 0), (0, cin_p - Cin), (0, 0)))

    # (Cout, 9*C) bf16 weight matrices, K ordered (ky, kx, c).
    w1_mat = jnp.transpose(w1_hwio, (3, 0, 1, 2)).reshape(
        Cout, 9 * cin_p).astype(_MXU_DTYPE)
    w2_mat = jnp.transpose(w2_hwio, (3, 0, 1, 2)).reshape(
        Cout, 9 * Cout).astype(_MXU_DTYPE)

    # Grid-invariant boundary masks for the 9 shifted images (hoisted out of
    # the kernel; resident in VMEM via a constant index_map).
    h_idx = jnp.arange(HW, dtype=jnp.int32) // W
    w_idx = jnp.arange(HW, dtype=jnp.int32) % W
    mask_rows = []
    for ky in range(3):
        for kx in range(3):
            oy, ox = ky - 1, kx - 1
            valid = jnp.ones((HW,), dtype=bool)
            if oy == -1:
                valid = valid & (h_idx >= 1)
            elif oy == 1:
                valid = valid & (h_idx < H - 1)
            if ox == -1:
                valid = valid & (w_idx >= 1)
            elif ox == 1:
                valid = valid & (w_idx < W - 1)
            mask_rows.append(valid)
    masks = jnp.stack(mask_rows).astype(jnp.float32)             # (9, HW)

    # Grid-invariant 0/1 pool-compaction matrix (keep lanes 2*ho*W + 2*wo),
    # padded to `pool_cols` output columns for unmasked lane-dense stores.
    q = jnp.arange(pool_cols, dtype=jnp.int32)
    src = 2 * (q // Wo) * W + 2 * (q % Wo)
    p = jnp.arange(HW, dtype=jnp.int32)
    sel = ((p[:, None] == src[None, :]) &
           (q[None, :] < HoWo)).astype(jnp.float32)              # (HW, pool_cols)

    bpe_act = jnp.dtype(x_nchw.dtype).itemsize
    bpe_w = jnp.dtype(_MXU_DTYPE).itemsize
    flops = (2 * N * HW * 9 * cin_p * Cout          # conv1
             + 2 * N * HW * 9 * Cout * Cout         # conv2
             + 2 * N * Cout * HW * pool_cols)       # pool compaction matmul
    bytes_accessed = (
        bpe_act * (N * cin_p * HW + N * Cout * HW + N * Cout * pool_cols)
        + bpe_w * (Cout * 9 * cin_p + Cout * 9 * Cout)
        + 4 * (9 * HW + HW * pool_cols))

    y_flat, ys_flat = pl.pallas_call(
        functools.partial(_stack_encoder_kernel, H=H, W=W),
        out_shape=(
            jax.ShapeDtypeStruct((N, Cout, HW), x_nchw.dtype),
            jax.ShapeDtypeStruct((N, Cout, pool_cols), x_nchw.dtype),
        ),
        grid=(N,),
        in_specs=[
            pl.BlockSpec((1, cin_p, HW), lambda n: (n, 0, 0)),
            pl.BlockSpec((Cout, 9 * cin_p), lambda n: (0, 0)),
            pl.BlockSpec((Cout, 9 * Cout), lambda n: (0, 0)),
            pl.BlockSpec((9, HW), lambda n: (0, 0)),
            pl.BlockSpec((HW, pool_cols), lambda n: (0, 0)),
        ],
        out_specs=(
            pl.BlockSpec((1, Cout, HW), lambda n: (n, 0, 0)),
            pl.BlockSpec((1, Cout, pool_cols), lambda n: (n, 0, 0)),
        ),
        compiler_params=pltpu.CompilerParams(
            dimension_semantics=("parallel",)),
        cost_estimate=pl.CostEstimate(
            flops=flops, transcendentals=0, bytes_accessed=bytes_accessed),
    )(x_flat, w1_mat, w2_mat, masks, sel)

    y = y_flat.reshape(N, Cout, H, W)
    y_small = ys_flat[:, :, :HoWo].reshape(N, Cout, Ho, Wo)
    return y, y_small


# ----------------------------------------------------------------------------
# Pure-JAX reference (emulates bf16 MXU operands with f32 accumulation, to
# match the kernel's numerics)
# ----------------------------------------------------------------------------
def _reference(x_nchw, w1_hwio, w2_hwio):
    xb = x_nchw.astype(_MXU_DTYPE)
    w1b = w1_hwio.astype(_MXU_DTYPE)
    w2b = w2_hwio.astype(_MXU_DTYPE)
    dn1 = lax.conv_dimension_numbers(xb.shape, w1b.shape,
                                     ("NCHW", "HWIO", "NCHW"))
    h = lax.conv_general_dilated(xb, w1b, (1, 1), ((1, 1), (1, 1)),
                                 dimension_numbers=dn1,
                                 preferred_element_type=jnp.float32)
    h = jnp.maximum(h, 0.0)
    dn2 = lax.conv_dimension_numbers(h.shape, w2b.shape,
                                     ("NCHW", "HWIO", "NCHW"))
    y = lax.conv_general_dilated(h.astype(_MXU_DTYPE), w2b, (1, 1),
                                 ((1, 1), (1, 1)), dimension_numbers=dn2,
                                 preferred_element_type=jnp.float32)
    y = jnp.maximum(y, 0.0)
    y_small = lax.reduce_window(y, -jnp.inf, lax.max,
                                window_dimensions=(1, 1, 2, 2),
                                window_strides=(1, 1, 2, 2), padding="VALID")
    return y, y_small


# ----------------------------------------------------------------------------
# Main
# ----------------------------------------------------------------------------
if __name__ == "__main__":
    key = jax.random.PRNGKey(0)
    k_x, k_w1, k_w2 = jax.random.split(key, 3)

    N, Cin, H, W = 2, 4, 16, 16   # x_channels = 4
    Cout = 8                      # y_channels = 8

    x = jax.random.normal(k_x, (N, Cin, H, W), dtype=jnp.float32)
    # Conv2d(bias=False) weights in HWIO layout.
    w1 = 0.1 * jax.random.normal(k_w1, (3, 3, Cin, Cout), dtype=jnp.float32)
    w2 = 0.1 * jax.random.normal(k_w2, (3, 3, Cout, Cout), dtype=jnp.float32)

    y, y_small = stack_encoder_forward(x, w1, w2)
    jax.block_until_ready((y, y_small))

    y_ref, y_small_ref = _reference(x, w1, w2)
    assert y.shape == (N, Cout, H, W)
    assert y_small.shape == (N, Cout, H // 2, W // 2)
    # bf16 MXU operands + f32 accumulation in both kernel and reference;
    # residual diffs come only from accumulation order / rare bf16 rounding.
    assert jnp.allclose(y, y_ref, atol=1e-2, rtol=1e-2)
    assert jnp.allclose(y_small, y_small_ref, atol=1e-2, rtol=1e-2)

    print("KERNEL_OK")
</pallas_src>

<mosaic_0001>
module attributes {stable_mosaic.version = 11 : i64} {
  func.func @_stack_encoder_kernel(%arg0: i32, %arg1: memref<1x8x256xf32, #tpu.memory_space<vmem>>, %arg2: memref<8x72xbf16, #tpu.memory_space<vmem>>, %arg3: memref<8x72xbf16, #tpu.memory_space<vmem>>, %arg4: memref<9x256xf32, #tpu.memory_space<vmem>>, %arg5: memref<256x128xf32, #tpu.memory_space<vmem>>, %arg6: memref<1x8x256xf32, #tpu.memory_space<vmem>>, %arg7: memref<1x8x128xf32, #tpu.memory_space<vmem>>) attributes {dimension_semantics = [#tpu.dimension_semantics<parallel>], iteration_bounds = array<i64: 2>, scalar_prefetch = 0 : i64, scratch_operands = 0 : i64, tpu.core_type = #tpu.core_type<tc>, window_params = [{transform_indices = @transform_0, window_bounds = array<i64: 1, 8, 256>}, {pipeline_mode = #tpu.pipeline_mode<synchronous>, transform_indices = @transform_1, window_bounds = array<i64: 8, 72>}, {pipeline_mode = #tpu.pipeline_mode<synchronous>, transform_indices = @transform_2, window_bounds = array<i64: 8, 72>}, {pipeline_mode = #tpu.pipeline_mode<synchronous>, transform_indices = @transform_3, window_bounds = array<i64: 9, 256>}, {pipeline_mode = #tpu.pipeline_mode<synchronous>, transform_indices = @transform_4, window_bounds = array<i64: 256, 128>}, {transform_indices = @transform_5, window_bounds = array<i64: 1, 8, 256>}, {transform_indices = @transform_6, window_bounds = array<i64: 1, 8, 128>}]} {
    %c0 = arith.constant 0 : index
    %c0_0 = arith.constant 0 : index
    %c0_1 = arith.constant 0 : index
    %0 = vector.load %arg1[%c0, %c0_0, %c0_1] : memref<1x8x256xf32, #tpu.memory_space<vmem>>, vector<1x8x256xf32>
    %1 = vector.shape_cast %0 : vector<1x8x256xf32> to vector<8x256xf32>
    %c0_2 = arith.constant 0 : index
    %c0_3 = arith.constant 0 : index
    %2 = vector.load %arg4[%c0_2, %c0_3] : memref<9x256xf32, #tpu.memory_space<vmem>>, vector<9x256xf32>
    %c17_i32 = arith.constant 17 : i32
    %3 = tpu.dynamic_rotate %1 by %c17_i32 dim 1 : vector<8x256xf32>, i32 -> vector<8x256xf32>
    %4 = vector.extract_strided_slice %2 {offsets = [0, 0], sizes = [1, 256], strides = [1, 1]} : vector<9x256xf32> to vector<1x256xf32>
    %5 = vector.shape_cast %4 : vector<1x256xf32> to vector<256xf32>
    %6 = vector.shape_cast %5 : vector<256xf32> to vector<1x256xf32>
    %7 = vector.broadcast %6 : vector<1x256xf32> to vector<8x256xf32>
    %8 = arith.mulf %3, %7 : vector<8x256xf32>
    %c16_i32 = arith.constant 16 : i32
    %9 = tpu.dynamic_rotate %1 by %c16_i32 dim 1 : vector<8x256xf32>, i32 -> vector<8x256xf32>
    %10 = vector.extract_strided_slice %2 {offsets = [1, 0], sizes = [1, 256], strides = [1, 1]} : vector<9x256xf32> to vector<1x256xf32>
    %11 = vector.shape_cast %10 : vector<1x256xf32> to vector<256xf32>
    %12 = vector.shape_cast %11 : vector<256xf32> to vector<1x256xf32>
    %13 = vector.broadcast %12 : vector<1x256xf32> to vector<8x256xf32>
    %14 = arith.mulf %9, %13 : vector<8x256xf32>
    %c15_i32 = arith.constant 15 : i32
    %15 = tpu.dynamic_rotate %1 by %c15_i32 dim 1 : vector<8x256xf32>, i32 -> vector<8x256xf32>
    %16 = vector.extract_strided_slice %2 {offsets = [2, 0], sizes = [1, 256], strides = [1, 1]} : vector<9x256xf32> to vector<1x256xf32>
    %17 = vector.shape_cast %16 : vector<1x256xf32> to vector<256xf32>
    %18 = vector.shape_cast %17 : vector<256xf32> to vector<1x256xf32>
    %19 = vector.broadcast %18 : vector<1x256xf32> to vector<8x256xf32>
    %20 = arith.mulf %15, %19 : vector<8x256xf32>
    %c1_i32 = arith.constant 1 : i32
    %21 = tpu.dynamic_rotate %1 by %c1_i32 dim 1 : vector<8x256xf32>, i32 -> vector<8x256xf32>
    %22 = vector.extract_strided_slice %2 {offsets = [3, 0], sizes = [1, 256], strides = [1, 1]} : vector<9x256xf32> to vector<1x256xf32>
    %23 = vector.shape_cast %22 : vector<1x256xf32> to vector<256xf32>
    %24 = vector.shape_cast %23 : vector<256xf32> to vector<1x256xf32>
    %25 = vector.broadcast %24 : vector<1x256xf32> to vector<8x256xf32>
    %26 = arith.mulf %21, %25 : vector<8x256xf32>
    %c255_i32 = arith.constant 255 : i32
    %27 = tpu.dynamic_rotate %1 by %c255_i32 dim 1 : vector<8x256xf32>, i32 -> vector<8x256xf32>
    %28 = vector.extract_strided_slice %2 {offsets = [5, 0], sizes = [1, 256], strides = [1, 1]} : vector<9x256xf32> to vector<1x256xf32>
    %29 = vector.shape_cast %28 : vector<1x256xf32> to vector<256xf32>
    %30 = vector.shape_cast %29 : vector<256xf32> to vector<1x256xf32>
    %31 = vector.broadcast %30 : vector<1x256xf32> to vector<8x256xf32>
    %32 = arith.mulf %27, %31 : vector<8x256xf32>
    %c241_i32 = arith.constant 241 : i32
    %33 = tpu.dynamic_rotate %1 by %c241_i32 dim 1 : vector<8x256xf32>, i32 -> vector<8x256xf32>
    %34 = vector.extract_strided_slice %2 {offsets = [6, 0], sizes = [1, 256], strides = [1, 1]} : vector<9x256xf32> to vector<1x256xf32>
    %35 = vector.shape_cast %34 : vector<1x256xf32> to vector<256xf32>
    %36 = vector.shape_cast %35 : vector<256xf32> to vector<1x256xf32>
    %37 = vector.broadcast %36 : vector<1x256xf32> to vector<8x256xf32>
    %38 = arith.mulf %33, %37 : vector<8x256xf32>
    %c240_i32 = arith.constant 240 : i32
    %39 = tpu.dynamic_rotate %1 by %c240_i32 dim 1 : vector<8x256xf32>, i32 -> vector<8x256xf32>
    %40 = vector.extract_strided_slice %2 {offsets = [7, 0], sizes = [1, 256], strides = [1, 1]} : vector<9x256xf32> to vector<1x256xf32>
    %41 = vector.shape_cast %40 : vector<1x256xf32> to vector<256xf32>
    %42 = vector.shape_cast %41 : vector<256xf32> to vector<1x256xf32>
    %43 = vector.broadcast %42 : vector<1x256xf32> to vector<8x256xf32>
    %44 = arith.mulf %39, %43 : vector<8x256xf32>
    %c239_i32 = arith.constant 239 : i32
    %45 = tpu.dynamic_rotate %1 by %c239_i32 dim 1 : vector<8x256xf32>, i32 -> vector<8x256xf32>
    %46 = vector.extract_strided_slice %2 {offsets = [8, 0], sizes = [1, 256], strides = [1, 1]} : vector<9x256xf32> to vector<1x256xf32>
    %47 = vector.shape_cast %46 : vector<1x256xf32> to vector<256xf32>
    %48 = vector.shape_cast %47 : vector<256xf32> to vector<1x256xf32>
    %49 = vector.broadcast %48 : vector<1x256xf32> to vector<8x256xf32>
    %50 = arith.mulf %45, %49 : vector<8x256xf32>
    %51 = tpu.concatenate %8, %14, %20, %26, %1, %32, %38, %44, %50 in 0 : vector<8x256xf32>, vector<8x256xf32>, vector<8x256xf32>, vector<8x256xf32>, vector<8x256xf32>, vector<8x256xf32>, vector<8x256xf32>, vector<8x256xf32>, vector<8x256xf32> -> vector<72x256xf32>
    %52 = arith.truncf %51 : vector<72x256xf32> to vector<72x256xbf16>
    %c0_4 = arith.constant 0 : index
    %c0_5 = arith.constant 0 : index
    %53 = vector.load %arg2[%c0_4, %c0_5] : memref<8x72xbf16, #tpu.memory_space<vmem>>, vector<8x72xbf16>
    %cst = arith.constant dense<0.000000e+00> : vector<8x256xf32>
    %54 = tpu.matmul %53, %52, %cst {dimension_numbers = #tpu.dot_dimension_numbers<[1], [0], [0], [1], [0, 0, 1, 1], [], []>} : vector<8x72xbf16>, vector<72x256xbf16>, vector<8x256xf32> -> vector<8x256xf32>
    %cst_6 = arith.constant 0.000000e+00 : f32
    %55 = vector.broadcast %cst_6 : f32 to vector<8x256xf32>
    %56 = arith.maximumf %54, %55 : vector<8x256xf32>
    %c17_i32_7 = arith.constant 17 : i32
    %57 = tpu.dynamic_rotate %56 by %c17_i32_7 dim 1 : vector<8x256xf32>, i32 -> vector<8x256xf32>
    %58 = vector.extract_strided_slice %2 {offsets = [0, 0], sizes = [1, 256], strides = [1, 1]} : vector<9x256xf32> to vector<1x256xf32>
    %59 = vector.shape_cast %58 : vector<1x256xf32> to vector<256xf32>
    %60 = vector.shape_cast %59 : vector<256xf32> to vector<1x256xf32>
    %61 = vector.broadcast %60 : vector<1x256xf32> to vector<8x256xf32>
    %62 = arith.mulf %57, %61 : vector<8x256xf32>
    %c16_i32_8 = arith.constant 16 : i32
    %63 = tpu.dynamic_rotate %56 by %c16_i32_8 dim 1 : vector<8x256xf32>, i32 -> vector<8x256xf32>
    %64 = vector.extract_strided_slice %2 {offsets = [1, 0], sizes = [1, 256], strides = [1, 1]} : vector<9x256xf32> to vector<1x256xf32>
    %65 = vector.shape_cast %64 : vector<1x256xf32> to vector<256xf32>
    %66 = vector.shape_cast %65 : vector<256xf32> to vector<1x256xf32>
    %67 = vector.broadcast %66 : vector<1x256xf32> to vector<8x256xf32>
    %68 = arith.mulf %63, %67 : vector<8x256xf32>
    %c15_i32_9 = arith.constant 15 : i32
    %69 = tpu.dynamic_rotate %56 by %c15_i32_9 dim 1 : vector<8x256xf32>, i32 -> vector<8x256xf32>
    %70 = vector.extract_strided_slice %2 {offsets = [2, 0], sizes = [1, 256], strides = [1, 1]} : vector<9x256xf32> to vector<1x256xf32>
    %71 = vector.shape_cast %70 : vector<1x256xf32> to vector<256xf32>
    %72 = vector.shape_cast %71 : vector<256xf32> to vector<1x256xf32>
    %73 = vector.broadcast %72 : vector<1x256xf32> to vector<8x256xf32>
    %74 = arith.mulf %69, %73 : vector<8x256xf32>
    %c1_i32_10 = arith.constant 1 : i32
    %75 = tpu.dynamic_rotate %56 by %c1_i32_10 dim 1 : vector<8x256xf32>, i32 -> vector<8x256xf32>
    %76 = vector.extract_strided_slice %2 {offsets = [3, 0], sizes = [1, 256], strides = [1, 1]} : vector<9x256xf32> to vector<1x256xf32>
    %77 = vector.shape_cast %76 : vector<1x256xf32> to vector<256xf32>
    %78 = vector.shape_cast %77 : vector<256xf32> to vector<1x256xf32>
    %79 = vector.broadcast %78 : vector<1x256xf32> to vector<8x256xf32>
    %80 = arith.mulf %75, %79 : vector<8x256xf32>
    %c255_i32_11 = arith.constant 255 : i32
    %81 = tpu.dynamic_rotate %56 by %c255_i32_11 dim 1 : vector<8x256xf32>, i32 -> vector<8x256xf32>
    %82 = vector.extract_strided_slice %2 {offsets = [5, 0], sizes = [1, 256], strides = [1, 1]} : vector<9x256xf32> to vector<1x256xf32>
    %83 = vector.shape_cast %82 : vector<1x256xf32> to vector<256xf32>
    %84 = vector.shape_cast %83 : vector<256xf32> to vector<1x256xf32>
    %85 = vector.broadcast %84 : vector<1x256xf32> to vector<8x256xf32>
    %86 = arith.mulf %81, %85 : vector<8x256xf32>
    %c241_i32_12 = arith.constant 241 : i32
    %87 = tpu.dynamic_rotate %56 by %c241_i32_12 dim 1 : vector<8x256xf32>, i32 -> vector<8x256xf32>
    %88 = vector.extract_strided_slice %2 {offsets = [6, 0], sizes = [1, 256], strides = [1, 1]} : vector<9x256xf32> to vector<1x256xf32>
    %89 = vector.shape_cast %88 : vector<1x256xf32> to vector<256xf32>
    %90 = vector.shape_cast %89 : vector<256xf32> to vector<1x256xf32>
    %91 = vector.broadcast %90 : vector<1x256xf32> to vector<8x256xf32>
    %92 = arith.mulf %87, %91 : vector<8x256xf32>
    %c240_i32_13 = arith.constant 240 : i32
    %93 = tpu.dynamic_rotate %56 by %c240_i32_13 dim 1 : vector<8x256xf32>, i32 -> vector<8x256xf32>
    %94 = vector.extract_strided_slice %2 {offsets = [7, 0], sizes = [1, 256], strides = [1, 1]} : vector<9x256xf32> to vector<1x256xf32>
    %95 = vector.shape_cast %94 : vector<1x256xf32> to vector<256xf32>
    %96 = vector.shape_cast %95 : vector<256xf32> to vector<1x256xf32>
    %97 = vector.broadcast %96 : vector<1x256xf32> to vector<8x256xf32>
    %98 = arith.mulf %93, %97 : vector<8x256xf32>
    %c239_i32_14 = arith.constant 239 : i32
    %99 = tpu.dynamic_rotate %56 by %c239_i32_14 dim 1 : vector<8x256xf32>, i32 -> vector<8x256xf32>
    %100 = vector.extract_strided_slice %2 {offsets = [8, 0], sizes = [1, 256], strides = [1, 1]} : vector<9x256xf32> to vector<1x256xf32>
    %101 = vector.shape_cast %100 : vector<1x256xf32> to vector<256xf32>
    %102 = vector.shape_cast %101 : vector<256xf32> to vector<1x256xf32>
    %103 = vector.broadcast %102 : vector<1x256xf32> to vector<8x256xf32>
    %104 = arith.mulf %99, %103 : vector<8x256xf32>
    %105 = tpu.concatenate %62, %68, %74, %80, %56, %86, %92, %98, %104 in 0 : vector<8x256xf32>, vector<8x256xf32>, vector<8x256xf32>, vector<8x256xf32>, vector<8x256xf32>, vector<8x256xf32>, vector<8x256xf32>, vector<8x256xf32>, vector<8x256xf32> -> vector<72x256xf32>
    %106 = arith.truncf %105 : vector<72x256xf32> to vector<72x256xbf16>
    %c0_15 = arith.constant 0 : index
    %c0_16 = arith.constant 0 : index
    %107 = vector.load %arg3[%c0_15, %c0_16] : memref<8x72xbf16, #tpu.memory_space<vmem>>, vector<8x72xbf16>
    %cst_17 = arith.constant dense<0.000000e+00> : vector<8x256xf32>
    %108 = tpu.matmul %107, %106, %cst_17 {dimension_numbers = #tpu.dot_dimension_numbers<[1], [0], [0], [1], [0, 0, 1, 1], [], []>} : vector<8x72xbf16>, vector<72x256xbf16>, vector<8x256xf32> -> vector<8x256xf32>
    %cst_18 = arith.constant 0.000000e+00 : f32
    %109 = vector.broadcast %cst_18 : f32 to vector<8x256xf32>
    %110 = arith.maximumf %108, %109 : vector<8x256xf32>
    %c0_19 = arith.constant 0 : index
    %c0_20 = arith.constant 0 : index
    %c0_21 = arith.constant 0 : index
    %111 = vector.load %arg6[%c0_19, %c0_20, %c0_21] : memref<1x8x256xf32, #tpu.memory_space<vmem>>, vector<1x8x256xf32>
    %112 = vector.shape_cast %111 : vector<1x8x256xf32> to vector<8x256xf32>
    %113 = vector.shape_cast %110 : vector<8x256xf32> to vector<1x8x256xf32>
    tpu.vector_store %arg6[%c0_19, %c0_20, %c0_21], %113 {strides = array<i32>} : memref<1x8x256xf32, #tpu.memory_space<vmem>>, vector<1x8x256xf32>,
    %c240_i32_22 = arith.constant 240 : i32
    %114 = tpu.dynamic_rotate %110 by %c240_i32_22 dim 1 : vector<8x256xf32>, i32 -> vector<8x256xf32>
    %115 = arith.maximumf %110, %114 : vector<8x256xf32>
    %c255_i32_23 = arith.constant 255 : i32
    %116 = tpu.dynamic_rotate %115 by %c255_i32_23 dim 1 : vector<8x256xf32>, i32 -> vector<8x256xf32>
    %117 = arith.maximumf %115, %116 : vector<8x256xf32>
    %c0_24 = arith.constant 0 : index
    %c0_25 = arith.constant 0 : index
    %118 = vector.load %arg5[%c0_24, %c0_25] : memref<256x128xf32, #tpu.memory_space<vmem>>, vector<256x128xf32>
    %cst_26 = arith.constant dense<0.000000e+00> : vector<8x128xf32>
    %119 = tpu.matmul %117, %118, %cst_26 {dimension_numbers = #tpu.dot_dimension_numbers<[1], [0], [0], [1], [0, 0, 1, 1], [], []>} : vector<8x256xf32>, vector<256x128xf32>, vector<8x128xf32> -> vector<8x128xf32>
    %c0_27 = arith.constant 0 : index
    %c0_28 = arith.constant 0 : index
    %c0_29 = arith.constant 0 : index
    %120 = vector.load %arg7[%c0_27, %c0_28, %c0_29] : memref<1x8x128xf32, #tpu.memory_space<vmem>>, vector<1x8x128xf32>
    %121 = vector.shape_cast %120 : vector<1x8x128xf32> to vector<8x128xf32>
    %122 = vector.shape_cast %119 : vector<8x128xf32> to vector<1x8x128xf32>
    tpu.vector_store %arg7[%c0_27, %c0_28, %c0_29], %122 {strides = array<i32>} : memref<1x8x128xf32, #tpu.memory_space<vmem>>, vector<1x8x128xf32>,
    return
  }
  func.func @transform_0(%arg0: i32) -> (i32, i32, i32) {
    %c0_i32 = arith.constant 0 : i32
    %c0_i32_0 = arith.constant 0 : i32
    %c0_i32_1 = arith.constant 0 : i32
    return %arg0, %c0_i32, %c0_i32_0 : i32, i32, i32
  }
  func.func @transform_1(%arg0: i32) -> (i32, i32) {
    %c0_i32 = arith.constant 0 : i32
    %c0_i32_0 = arith.constant 0 : i32
    %c0_i32_1 = arith.constant 0 : i32
    return %c0_i32, %c0_i32_0 : i32, i32
  }
  func.func @transform_2(%arg0: i32) -> (i32, i32) {
    %c0_i32 = arith.constant 0 : i32
    %c0_i32_0 = arith.constant 0 : i32
    %c0_i32_1 = arith.constant 0 : i32
    return %c0_i32, %c0_i32_0 : i32, i32
  }
  func.func @transform_3(%arg0: i32) -> (i32, i32) {
    %c0_i32 = arith.constant 0 : i32
    %c0_i32_0 = arith.constant 0 : i32
    %c0_i32_1 = arith.constant 0 : i32
    return %c0_i32, %c0_i32_0 : i32, i32
  }
  func.func @transform_4(%arg0: i32) -> (i32, i32) {
    %c0_i32 = arith.constant 0 : i32
    %c0_i32_0 = arith.constant 0 : i32
    %c0_i32_1 = arith.constant 0 : i32
    return %c0_i32, %c0_i32_0 : i32, i32
  }
  func.func @transform_5(%arg0: i32) -> (i32, i32, i32) {
    %c0_i32 = arith.constant 0 : i32
    %c0_i32_0 = arith.constant 0 : i32
    %c0_i32_1 = arith.constant 0 : i32
    return %arg0, %c0_i32, %c0_i32_0 : i32, i32, i32
  }
  func.func @transform_6(%arg0: i32) -> (i32, i32, i32) {
    %c0_i32 = arith.constant 0 : i32
    %c0_i32_0 = arith.constant 0 : i32
    %c0_i32_1 = arith.constant 0 : i32
    return %arg0, %c0_i32, %c0_i32_0 : i32, i32, i32
  }
}

</mosaic_0001>

<llo_original>
// kernel: stack_encoder_forward.1
$region0: #{stack_encoder_forward.1}
  #allocation0 [shape = 'u32[]', space=smem, size = 0x4, offset = 0x4, fixed_abs, tag = 'smem constant byte address 0x4 - core index']
  #allocation1 [shape = 'u32[144,128]{1,0:T(1,128)}', space=vmem, size = 0x12000, scoped, tag = 'internal scratch']
  %s0 = inlined_call_operand.vmem [shape: f32[2,8,256], index: 0, kind: input, shape index: {}]
  %s1 = inlined_call_operand.vmem [shape: bf16[8,72], index: 1, kind: input, shape index: {}]
  %s2 = inlined_call_operand.vmem [shape: bf16[8,72], index: 2, kind: input, shape index: {}]
  %s3 = inlined_call_operand.vmem [shape: f32[9,256], index: 3, kind: input, shape index: {}]
  %s4 = inlined_call_operand.vmem [shape: f32[256,128], index: 4, kind: input, shape index: {}]
  %s5 = inlined_call_operand.vmem [shape: f32[2,8,256], index: 5, kind: output, shape index: {0}]
  %s6 = inlined_call_operand.vmem [shape: f32[2,8,128], index: 6, kind: output, shape index: {1}]
  %7 = xla_tuple %s5, %s6
  %s8 = sld [smem:[#allocation0]]
  $region61: #{stack_encoder_forward.1} parent=0
    _
  %s10 = ssub.s32 1, %s8
  %s11 = scalar_select 0, %s10, %s8
  loop: start=0, step=1, limit=4
  $region2: #{stack_encoder_forward.1} parent=0 // loop_pre_header
    _
  $region3: #{stack_encoder_forward.1} parent=0 // loop_header
    %s13 = sphi 0, %s17
    %p14 = scmp.ge.s32.totalorder %s13, 4
    %s23 = sphi 0, %s25
    %s26 = sphi 0, %s23
    %s27 = sphi 0, %s26
    %s43 = sphi 0, %s27
    %s47 = sphi 0, %s47
    %s49 = sphi 0, %s47
    %s50 = sphi 0, %s49
    %s64 = sphi 0, %s50
    %s68 = sphi 0, %s68
    %s70 = sphi 0, %s68
    %s71 = sphi 0, %s70
    %s85 = sphi 0, %s71
    %s89 = sphi 0, %s89
    %s91 = sphi 0, %s89
    %s92 = sphi 0, %s91
    %s106 = sphi 0, %s92
    %s110 = sphi 0, %s110
    %s112 = sphi 0, %s110
    %s113 = sphi 0, %s112
    %s127 = sphi 0, %s113
    %s133 = sphi 0, %s135
    %s136 = sphi 0, %s133
    %s137 = sphi 0, %s136
    %s153 = sphi 0, %s137
    %s159 = sphi 0, %s161
    %s162 = sphi 0, %s159
    %s163 = sphi 0, %s162
    %s179 = sphi 0, %s163
  $region4: #{stack_encoder_forward.1} parent=0 // loop_header_branch
    %16 = sbr.rel (%p14) target = $region8
  $region5: #{stack_encoder_forward.1} parent=0 // loop_body
    %s18 = ssub.s32 %s13, 1
    %s19 = ssub.s32 %s13, 2
    %s20 = sadd.s32 %s13, 1
    %s21 = ssub.s32 %s13, %s20
    %p22 = scmp.eq.s32.totalorder %s21, 0
    %s24 = sadd.s32 %s23, 1
    %s25 = scalar_select %p22, %s23, %s24
    %p28 = pneg %p22
    %p29 = scmp.eq.s32.totalorder %s13, 1
    %p30 = por %p28, %p29
    %p31 = scmp.ne.s32.totalorder %s23, %s26
    %p32 = scmp.eq.s32.totalorder %s13, 0
    %p33 = por %p31, %p32
    %p34 = scmp.ne.s32.totalorder %s23, %s26
    %p35 = scmp.eq.s32.totalorder %s18, 1
    %p36 = por %p34, %p35
    %p37 = scmp.ne.s32.totalorder %s26, %s27
    %p38 = scmp.eq.s32.totalorder %s18, 0
    %p39 = por %p37, %p38
    %p40 = scmp.ne.s32.totalorder %s26, %s27
    %p41 = scmp.eq.s32.totalorder %s19, 1
    %p42 = por %p40, %p41
    %p44 = scmp.ne.s32.totalorder %s27, %s43
    %p45 = scmp.eq.s32.totalorder %s19, 0
    %p46 = por %p44, %p45
    %s48 = sadd.s32 %s47, 1
    %p51 = scmp.eq.s32.totalorder %s13, 1
    %p52 = scmp.ne.s32.totalorder %s47, %s49
    %p53 = scmp.eq.s32.totalorder %s13, 0
    %p54 = por %p52, %p53
    %p55 = scmp.ne.s32.totalorder %s47, %s49
    %p56 = scmp.eq.s32.totalorder %s18, 1
    %p57 = por %p55, %p56
    %p58 = scmp.ne.s32.totalorder %s49, %s50
    %p59 = scmp.eq.s32.totalorder %s18, 0
    %p60 = por %p58, %p59
    %p61 = scmp.ne.s32.totalorder %s49, %s50
    %p62 = scmp.eq.s32.totalorder %s19, 1
    %p63 = por %p61, %p62
    %p65 = scmp.ne.s32.totalorder %s50, %s64
    %p66 = scmp.eq.s32.totalorder %s19, 0
    %p67 = por %p65, %p66
    %s69 = sadd.s32 %s68, 1
    %p72 = scmp.eq.s32.totalorder %s13, 1
    %p73 = scmp.ne.s32.totalorder %s68, %s70
    %p74 = scmp.eq.s32.totalorder %s13, 0
    %p75 = por %p73, %p74
    %p76 = scmp.ne.s32.totalorder %s68, %s70
    %p77 = scmp.eq.s32.totalorder %s18, 1
    %p78 = por %p76, %p77
    %p79 = scmp.ne.s32.totalorder %s70, %s71
    %p80 = scmp.eq.s32.totalorder %s18, 0
    %p81 = por %p79, %p80
    %p82 = scmp.ne.s32.totalorder %s70, %s71
    %p83 = scmp.eq.s32.totalorder %s19, 1
    %p84 = por %p82, %p83
    %p86 = scmp.ne.s32.totalorder %s71, %s85
    %p87 = scmp.eq.s32.totalorder %s19, 0
    %p88 = por %p86, %p87
    %s90 = sadd.s32 %s89, 1
    %p93 = scmp.eq.s32.totalorder %s13, 1
    %p94 = scmp.ne.s32.totalorder %s89, %s91
    %p95 = scmp.eq.s32.totalorder %s13, 0
    %p96 = por %p94, %p95
    %p97 = scmp.ne.s32.totalorder %s89, %s91
    %p98 = scmp.eq.s32.totalorder %s18, 1
    %p99 = por %p97, %p98
    %p100 = scmp.ne.s32.totalorder %s91, %s92
    %p101 = scmp.eq.s32.totalorder %s18, 0
    %p102 = por %p100, %p101
    %p103 = scmp.ne.s32.totalorder %s91, %s92
    %p104 = scmp.eq.s32.totalorder %s19, 1
    %p105 = por %p103, %p104
    %p107 = scmp.ne.s32.totalorder %s92, %s106
    %p108 = scmp.eq.s32.totalorder %s19, 0
    %p109 = por %p107, %p108
    %s111 = sadd.s32 %s110, 1
    %p114 = scmp.eq.s32.totalorder %s13, 1
    %p115 = scmp.ne.s32.totalorder %s110, %s112
    %p116 = scmp.eq.s32.totalorder %s13, 0
    %p117 = por %p115, %p116
    %p118 = scmp.ne.s32.totalorder %s110, %s112
    %p119 = scmp.eq.s32.totalorder %s18, 1
    %p120 = por %p118, %p119
    %p121 = scmp.ne.s32.totalorder %s112, %s113
    %p122 = scmp.eq.s32.totalorder %s18, 0
    %p123 = por %p121, %p122
    %p124 = scmp.ne.s32.totalorder %s112, %s113
    %p125 = scmp.eq.s32.totalorder %s19, 1
    %p126 = por %p124, %p125
    %p128 = scmp.ne.s32.totalorder %s113, %s127
    %p129 = scmp.eq.s32.totalorder %s19, 0
    %p130 = por %p128, %p129
    %s131 = ssub.s32 %s13, %s20
    %p132 = scmp.eq.s32.totalorder %s131, 0
    %s134 = sadd.s32 %s133, 1
    %s135 = scalar_select %p132, %s133, %s134
    %p138 = pneg %p132
    %p139 = scmp.eq.s32.totalorder %s13, 1
    %p140 = por %p138, %p139
    %p141 = scmp.ne.s32.totalorder %s133, %s136
    %p142 = scmp.eq.s32.totalorder %s13, 0
    %p143 = por %p141, %p142
    %p144 = scmp.ne.s32.totalorder %s133, %s136
    %p145 = scmp.eq.s32.totalorder %s18, 1
    %p146 = por %p144, %p145
    %p147 = scmp.ne.s32.totalorder %s136, %s137
    %p148 = scmp.eq.s32.totalorder %s18, 0
    %p149 = por %p147, %p148
    %p150 = scmp.ne.s32.totalorder %s136, %s137
    %p151 = scmp.eq.s32.totalorder %s19, 1
    %p152 = por %p150, %p151
    %p154 = scmp.ne.s32.totalorder %s137, %s153
    %p155 = scmp.eq.s32.totalorder %s19, 0
    %p156 = por %p154, %p155
    %s157 = ssub.s32 %s13, %s20
    %p158 = scmp.eq.s32.totalorder %s157, 0
    %s160 = sadd.s32 %s159, 1
    %s161 = scalar_select %p158, %s159, %s160
    %p164 = pneg %p158
    %p165 = scmp.eq.s32.totalorder %s13, 1
    %p166 = por %p164, %p165
    %p167 = scmp.ne.s32.totalorder %s159, %s162
    %p168 = scmp.eq.s32.totalorder %s13, 0
    %p169 = por %p167, %p168
    %p170 = scmp.ne.s32.totalorder %s159, %s162
    %p171 = scmp.eq.s32.totalorder %s18, 1
    %p172 = por %p170, %p171
    %p173 = scmp.ne.s32.totalorder %s162, %s163
    %p174 = scmp.eq.s32.totalorder %s18, 0
    %p175 = por %p173, %p174
    %p176 = scmp.ne.s32.totalorder %s162, %s163
    %p177 = scmp.eq.s32.totalorder %s19, 1
    %p178 = por %p176, %p177
    %p180 = scmp.ne.s32.totalorder %s163, %s179
    %p181 = scmp.eq.s32.totalorder %s19, 0
    %p182 = por %p180, %p181
    %p183 = scmp.le.s32.totalorder 1, %s13
    %p184 = scmp.lt.s32.totalorder %s13, 3
    %p185 = pnand %p183, %p184
    %p186 = pneg %p185
    // Predicated region
    $region9: #{stack_encoder_forward.1} parent=5 // pred_check
      _
    $region10: #{stack_encoder_forward.1} parent=5 // pred_check_branch
      %188 = sbr.rel (%p185) target = $region12
    $region11: #{stack_encoder_forward.1} parent=5 // pred_region
      %s189 = ssub.s32 %s13, 1
      // Predicated region
      $region13: #{stack_encoder_forward.1} parent=11 // pred_check
        %p190 = pneg %p60
      $region14: #{stack_encoder_forward.1} parent=11 // pred_check_branch
        %192 = sbr.rel (%p190) target = $region16
      $region15: #{stack_encoder_forward.1} parent=11 // pred_region
        _
      $region16: #{stack_encoder_forward.1} parent=11 // pred_fallthru
        _
      // Predicated region
      $region17: #{stack_encoder_forward.1} parent=11 // pred_check
        %p193 = pneg %p81
      $region18: #{stack_encoder_forward.1} parent=11 // pred_check_branch
        %195 = sbr.rel (%p193) target = $region20
      $region19: #{stack_encoder_forward.1} parent=11 // pred_region
        _
      $region20: #{stack_encoder_forward.1} parent=11 // pred_fallthru
        _
      // Predicated region
      $region21: #{stack_encoder_forward.1} parent=11 // pred_check
        %p196 = pneg %p102
      $region22: #{stack_encoder_forward.1} parent=11 // pred_check_branch
        %198 = sbr.rel (%p196) target = $region24
      $region23: #{stack_encoder_forward.1} parent=11 // pred_region
        _
      $region24: #{stack_encoder_forward.1} parent=11 // pred_fallthru
        _
      // Predicated region
      $region25: #{stack_encoder_forward.1} parent=11 // pred_check
        %p199 = pneg %p123
      $region26: #{stack_encoder_forward.1} parent=11 // pred_check_branch
        %201 = sbr.rel (%p199) target = $region28
      $region27: #{stack_encoder_forward.1} parent=11 // pred_region
        _
      $region28: #{stack_encoder_forward.1} parent=11 // pred_fallthru
        _
    $region12: #{stack_encoder_forward.1} parent=5 // pred_fallthru
      _
    %p202 = scmp.lt.s32.totalorder %s13, 2
    // Predicated region
    $region29: #{stack_encoder_forward.1} parent=5 // pred_check
      %p203 = pneg %p202
    $region30: #{stack_encoder_forward.1} parent=5 // pred_check_branch
      %205 = sbr.rel (%p203) target = $region32
    $region31: #{stack_encoder_forward.1} parent=5 // pred_region
      // Predicated region
      $region33: #{stack_encoder_forward.1} parent=31 // pred_check
        %p206 = pneg %p33
      $region34: #{stack_encoder_forward.1} parent=31 // pred_check_branch
        %208 = sbr.rel (%p206) target = $region36
      $region35: #{stack_encoder_forward.1} parent=31 // pred_region
        %p209 = scmp.lt.s32.totalorder %s13, 1
        %s210 = scalar_select %p209, %s13, 1
        %s211 = smul.addr %s210, 2
        %s212 = smul.addr %s211, 8
        %s213 = scalar_lea.vmem %s0, %s212
      $region36: #{stack_encoder_forward.1} parent=31 // pred_fallthru
        _
    $region32: #{stack_encoder_forward.1} parent=5 // pred_fallthru
      _
    %p214 = scmp.le.s32.totalorder 1, %s13
    %p215 = scmp.lt.s32.totalorder %s13, 3
    %p216 = pnand %p214, %p215
    %p217 = pneg %p216
    // Predicated region
    $region37: #{stack_encoder_forward.1} parent=5 // pred_check
      _
    $region38: #{stack_encoder_forward.1} parent=5 // pred_check_branch
      %219 = sbr.rel (%p216) target = $region40
    $region39: #{stack_encoder_forward.1} parent=5 // pred_region
      %s220 = ssub.s32 %s13, 1
      %p221 = scmp.lt.s32.totalorder %s18, 1
      %s222 = scalar_select %p221, %s18, 1
      %s223 = smul.addr %s222, 2
      %s224 = smul.addr %s223, 8
      %s225 = scalar_lea.vmem %s0, %s224
      %p226 = pneg %p39
      %p227 = pneg %p36
      %p228 = pneg %p60
      %p229 = pneg %p57
      %p230 = pneg %p81
      %p231 = pneg %p78
      %p232 = pneg %p102
      %p233 = pneg %p99
      %p234 = pneg %p123
      %p235 = pneg %p120
      %p236 = pneg %p149
      %p237 = pneg %p146
      %p238 = scmp.lt.s32.totalorder %s18, 1
      %s239 = scalar_select %p238, %s18, 1
      %s240 = smul.addr %s239, 2
      %s241 = smul.addr %s240, 8
      %s242 = scalar_lea.vmem %s5, %s241
      %p243 = pneg %p175
      %p244 = pneg %p172
      %p245 = scmp.lt.s32.totalorder %s18, 1
      %s246 = scalar_select %p245, %s18, 1
      %s247 = smul.addr %s246, 8
      %s248 = scalar_lea.vmem %s6, %s247
      %p249 = scmp.lt.s32.totalorder %s18, 1
      %s250 = scalar_select %p249, %s18, 1
      %s251 = smul.addr %s250, 2
      %s252 = smul.addr %s251, 8
      %s253 = scalar_lea.vmem %s0, %s252
      %p254 = scmp.lt.s32.totalorder %s18, 1
      %s255 = scalar_select %p254, %s18, 1
      %s256 = smul.addr %s255, 2
      %s257 = smul.addr %s256, 8
      %s258 = scalar_lea.vmem %s5, %s257
      %p259 = scmp.lt.s32.totalorder %s18, 1
      %s260 = scalar_select %p259, %s18, 1
      %s261 = smul.addr %s260, 8
      %s262 = scalar_lea.vmem %s6, %s261
      %v264 = vld [vmem:[%s253] sm:$0xff]
      %v265 = vld [vmem:[%s253 + $0x8] sm:$0xff]
      %v266 = vld [vmem:[%s3] sm:$0xff]
      %v267 = vld [vmem:[%s3 + $0x8] sm:$0xff]
      %v268 = vld [vmem:[%s3 + $0x10] sm:$0x1]
      %v269 = vld [vmem:[%s3 + $0x18] sm:$0x1]
      %270 = vrot.lane.b32.xlu0 %v264, 17
      %v271 = vpop.permute.xlu0 %270
      %272 = vrot.lane.b32.xlu0 %v265, 17
      %v273 = vpop.permute.xlu0 %272
      %v274 = vlaneseq
      %v275 = vand.u32 %v274, 127
      %vm276 = vcmp.lt.s32.totalorder %v275, 17
      %v277 = vsel %vm276, %v271, %v273
      %v278 = vsel %vm276, %v273, %v271
      %v279 = vlaneseq
      %v280 = vshrl.u32 %v279, 7
      %v281 = vsub.s32 0, %v280
      %v282 = vrot.slane %v266, %v281
      %v283 = vlaneseq
      %v284 = vshrl.u32 %v283, 7
      %v285 = vsub.s32 0, %v284
      %v286 = vrot.slane %v267, %v285
      %v287 = vmul.f32 %v278, %v282
      %v288 = vmul.f32 %v277, %v286
      %289 = vrot.lane.b32.xlu0 %v264, 16
      %v290 = vpop.permute.xlu0 %289
      %291 = vrot.lane.b32.xlu0 %v265, 16
      %v292 = vpop.permute.xlu0 %291
      %vm293 = vcmp.lt.s32.totalorder %v275, 16
      %v294 = vsel %vm293, %v290, %v292
      %v295 = vsel %vm293, %v292, %v290
      %v296 = vlaneseq
      %v297 = vshrl.u32 %v296, 7
      %v298 = vsub.s32 1, %v297
      %v299 = vrot.slane %v266, %v298
      %v300 = vlaneseq
      %v301 = vshrl.u32 %v300, 7
      %v302 = vsub.s32 1, %v301
      %v303 = vrot.slane %v267, %v302
      %v304 = vmul.f32 %v295, %v299
      %v305 = vmul.f32 %v294, %v303
      %306 = vrot.lane.b32.xlu0 %v264, 15
      %v307 = vpop.permute.xlu0 %306
      %308 = vrot.lane.b32.xlu0 %v265, 15
      %v309 = vpop.permute.xlu0 %308
      %vm310 = vcmp.lt.s32.totalorder %v275, 15
      %v311 = vsel %vm310, %v307, %v309
      %v312 = vsel %vm310, %v309, %v307
      %v313 = vlaneseq
      %v314 = vshrl.u32 %v313, 7
      %v315 = vsub.s32 2, %v314
      %v316 = vrot.slane %v266, %v315
      %v317 = vlaneseq
      %v318 = vshrl.u32 %v317, 7
      %v319 = vsub.s32 2, %v318
      %v320 = vrot.slane %v267, %v319
      %v321 = vmul.f32 %v312, %v316
      %v322 = vmul.f32 %v311, %v320
      %323 = vrot.lane.b32.xlu0 %v264, 1
      %v324 = vpop.permute.xlu0 %323
      %325 = vrot.lane.b32.xlu0 %v265, 1
      %v326 = vpop.permute.xlu0 %325
      %vm327 = vcmp.lt.s32.totalorder %v275, 1
      %v328 = vsel %vm327, %v324, %v326
      %v329 = vsel %vm327, %v326, %v324
      %v330 = vlaneseq
      %v331 = vshrl.u32 %v330, 7
      %v332 = vsub.s32 3, %v331
      %v333 = vrot.slane %v266, %v332
      %v334 = vlaneseq
      %v335 = vshrl.u32 %v334, 7
      %v336 = vsub.s32 3, %v335
      %v337 = vrot.slane %v267, %v336
      %v338 = vmul.f32 %v329, %v333
      %v339 = vmul.f32 %v328, %v337
      %340 = vrot.lane.b32.xlu0 %v264, 127
      %v341 = vpop.permute.xlu0 %340
      %342 = vrot.lane.b32.xlu0 %v265, 127
      %v343 = vpop.permute.xlu0 %342
      %vm344 = vcmp.lt.s32.totalorder %v275, 127
      %v345 = vsel %vm344, %v341, %v343
      %v346 = vsel %vm344, %v343, %v341
      %v347 = vlaneseq
      %v348 = vshrl.u32 %v347, 7
      %v349 = vsub.s32 5, %v348
      %v350 = vrot.slane %v266, %v349
      %v351 = vlaneseq
      %v352 = vshrl.u32 %v351, 7
      %v353 = vsub.s32 5, %v352
      %v354 = vrot.slane %v267, %v353
      %v355 = vmul.f32 %v345, %v350
      %v356 = vmul.f32 %v346, %v354
      %357 = vrot.lane.b32.xlu0 %v264, 113
      %v358 = vpop.permute.xlu0 %357
      %359 = vrot.lane.b32.xlu0 %v265, 113
      %v360 = vpop.permute.xlu0 %359
      %vm361 = vcmp.lt.s32.totalorder %v275, 113
      %v362 = vsel %vm361, %v358, %v360
      %v363 = vsel %vm361, %v360, %v358
      %v364 = vlaneseq
      %v365 = vshrl.u32 %v364, 7
      %v366 = vsub.s32 6, %v365
      %v367 = vrot.slane %v266, %v366
      %v368 = vlaneseq
      %v369 = vshrl.u32 %v368, 7
      %v370 = vsub.s32 6, %v369
      %v371 = vrot.slane %v267, %v370
      %v372 = vmul.f32 %v362, %v367
      %v373 = vmul.f32 %v363, %v371
      %374 = vrot.lane.b32.xlu0 %v264, 112
      %v375 = vpop.permute.xlu0 %374
      %376 = vrot.lane.b32.xlu0 %v265, 112
      %v377 = vpop.permute.xlu0 %376
      %vm378 = vcmp.lt.s32.totalorder %v275, 112
      %v379 = vsel %vm378, %v375, %v377
      %v380 = vsel %vm378, %v377, %v375
      %v381 = vlaneseq
      %v382 = vshrl.u32 %v381, 7
      %v383 = vsub.s32 7, %v382
      %v384 = vrot.slane %v266, %v383
      %v385 = vlaneseq
      %v386 = vshrl.u32 %v385, 7
      %v387 = vsub.s32 7, %v386
      %v388 = vrot.slane %v267, %v387
      %v389 = vmul.f32 %v379, %v384
      %v390 = vmul.f32 %v380, %v388
      %391 = vrot.lane.b32.xlu0 %v264, 111
      %v392 = vpop.permute.xlu0 %391
      %393 = vrot.lane.b32.xlu0 %v265, 111
      %v394 = vpop.permute.xlu0 %393
      %vm395 = vcmp.lt.s32.totalorder %v275, 111
      %v396 = vsel %vm395, %v392, %v394
      %v397 = vsel %vm395, %v394, %v392
      %v398 = vlaneseq
      %v399 = vshrl.u32 %v398, 7
      %v400 = vsub.s32 0, %v399
      %v401 = vrot.slane %v268, %v400
      %v402 = vlaneseq
      %v403 = vshrl.u32 %v402, 7
      %v404 = vsub.s32 0, %v403
      %v405 = vrot.slane %v269, %v404
      %v406 = vmul.f32 %v396, %v401
      %v407 = vmul.f32 %v397, %v405
      %v408 = vpack.c.bf16 %v304, %v287
      %v409 = vpack.c.bf16 %v305, %v288
      %v410 = vpack.c.bf16 %v338, %v321
      %v411 = vpack.c.bf16 %v339, %v322
      %v412 = vpack.c.bf16 %v355, %v264
      %v413 = vpack.c.bf16 %v356, %v265
      %v414 = vpack.c.bf16 %v389, %v372
      %v415 = vpack.c.bf16 %v390, %v373
      %v416 = vpack.c.bf16 %v406, %v406
      %v417 = vpack.c.bf16 %v407, %v407
      %v418 = vld [vmem:[%s1] sm:$0xf]
      %vm419 = vcmask 588800
      %v421 = vsel %vm419, %v418, 0
      %vm423 = vcmask 1043456
      %v425 = vsel %vm423, %v416, 0
      %v428 = vsel %vm423, %v417, 0
      %430 = vmatprep.subr.bf16.mxu0 0
      %431 = vmatpush1.bf16.msra.mxu0 0
      %432 = vmatprep.subr.bf16.mxu0 0
      %433 = vmatpush1.bf16.msra.mxu0 0
      %434 = vmatprep.subr.bf16.mxu0 0
      %435 = vmatpush1.bf16.msra.mxu0 0
      %436 = vmatprep.subr.bf16.mxu0 %v428
      %437 = vmatpush1.bf16.msra.mxu0 %v425
      %438 = vmatprep.subr.bf16.mxu0 %v415
      %439 = vmatpush1.bf16.msra.mxu0 %v414
      %440 = vmatprep.subr.bf16.mxu0 %v413
      %441 = vmatpush1.bf16.msra.mxu0 %v412
      %442 = vmatprep.subr.bf16.mxu0 %v411
      %443 = vmatpush1.bf16.msra.mxu0 %v410
      %444 = vmatprep.subr.bf16.mxu0 %v409
      %445 = vmatpush1.bf16.msra.mxu0 %v408
      %446 = vmatprep.subr.bf16.mxu0 0
      %447 = vmatpush2.bf16.msra.mxu0 0
      %448 = vmatprep.subr.bf16.mxu0 0
      %449 = vmatpush2.bf16.msra.mxu0 0
      %450 = vmatprep.subr.bf16.mxu0 0
      %451 = vmatpush2.bf16.msra.mxu0 0
      %452 = vmatprep.subr.bf16.mxu0 0
      %453 = vmatpush2.bf16.msra.mxu0 0
      %454 = vmatprep.subr.bf16.mxu0 0
      %455 = vmatpush2.bf16.msra.mxu0 0
      %456 = vmatprep.subr.bf16.mxu0 0
      %457 = vmatpush2.bf16.msra.mxu0 0
      %458 = vmatprep.subr.bf16.mxu0 0
      %459 = vmatpush2.bf16.msra.mxu0 0
      %460 = vmatprep.subr.bf16.mxu0 0
      %461 = vmatpush2.bf16.msra.mxu0 0
      %462 = vmatprep.mubr.bf16.mxu0 0
      %463 = vmatmul.mubr.bf16.gmra.mxu0 %v421
      %v464 = vpop.f32.mrf.mxu0
      %v465 = vadd.f32 0.0, %v464
      %v466 = vpop.f32.mrf.mxu0
      %v467 = vadd.f32 0.0, %v466
      %v468 = vpop.f32.mrf.mxu0
      %v469 = vpop.f32.mrf.mxu0
      %470 = vdwg.mxu0
      %v471 = vmax.f32 %v465, 0.0
      %v472 = vmax.f32 %v467, 0.0
      %473 = vrot.lane.b32.xlu0 %v471, 17
      %v474 = vpop.permute.xlu0 %473
      %475 = vrot.lane.b32.xlu0 %v472, 17
      %v476 = vpop.permute.xlu0 %475
      %v477 = vsel %vm276, %v474, %v476
      %v478 = vsel %vm276, %v476, %v474
      %v479 = vmul.f32 %v478, %v282
      %v480 = vmul.f32 %v477, %v286
      %481 = vrot.lane.b32.xlu0 %v471, 16
      %v482 = vpop.permute.xlu0 %481
      %483 = vrot.lane.b32.xlu0 %v472, 16
      %v484 = vpop.permute.xlu0 %483
      %v485 = vsel %vm293, %v482, %v484
      %v486 = vsel %vm293, %v484, %v482
      %v487 = vmul.f32 %v486, %v299
      %v488 = vmul.f32 %v485, %v303
      %489 = vrot.lane.b32.xlu0 %v471, 15
      %v490 = vpop.permute.xlu0 %489
      %491 = vrot.lane.b32.xlu0 %v472, 15
      %v492 = vpop.permute.xlu0 %491
      %v493 = vsel %vm310, %v490, %v492
      %v494 = vsel %vm310, %v492, %v490
      %v495 = vmul.f32 %v494, %v316
      %v496 = vmul.f32 %v493, %v320
      %497 = vrot.lane.b32.xlu0 %v471, 1
      %v498 = vpop.permute.xlu0 %497
      %499 = vrot.lane.b32.xlu0 %v472, 1
      %v500 = vpop.permute.xlu0 %499
      %v501 = vsel %vm327, %v498, %v500
      %v502 = vsel %vm327, %v500, %v498
      %v503 = vmul.f32 %v502, %v333
      %v504 = vmul.f32 %v501, %v337
      %505 = vrot.lane.b32.xlu0 %v471, 127
      %v506 = vpop.permute.xlu0 %505
      %507 = vrot.lane.b32.xlu0 %v472, 127
      %v508 = vpop.permute.xlu0 %507
      %v509 = vsel %vm344, %v506, %v508
      %v510 = vsel %vm344, %v508, %v506
      %v511 = vmul.f32 %v509, %v350
      %v512 = vmul.f32 %v510, %v354
      %513 = vrot.lane.b32.xlu0 %v471, 113
      %v514 = vpop.permute.xlu0 %513
      %515 = vrot.lane.b32.xlu0 %v472, 113
      %v516 = vpop.permute.xlu0 %515
      %v517 = vsel %vm361, %v514, %v516
      %v518 = vsel %vm361, %v516, %v514
      %v519 = vmul.f32 %v517, %v367
      %v520 = vmul.f32 %v518, %v371
      %521 = vrot.lane.b32.xlu0 %v471, 112
      %v522 = vpop.permute.xlu0 %521
      %523 = vrot.lane.b32.xlu0 %v472, 112
      %v524 = vpop.permute.xlu0 %523
      %v525 = vsel %vm378, %v522, %v524
      %v526 = vsel %vm378, %v524, %v522
      %v527 = vmul.f32 %v525, %v384
      %v528 = vmul.f32 %v526, %v388
      %529 = vrot.lane.b32.xlu0 %v471, 111
      %v530 = vpop.permute.xlu0 %529
      %531 = vrot.lane.b32.xlu0 %v472, 111
      %v532 = vpop.permute.xlu0 %531
      %v533 = vsel %vm395, %v530, %v532
      %v534 = vsel %vm395, %v532, %v530
      %v535 = vmul.f32 %v533, %v401
      %v536 = vmul.f32 %v534, %v405
      %v537 = vpack.c.bf16 %v487, %v479
      %v538 = vpack.c.bf16 %v488, %v480
      %v539 = vpack.c.bf16 %v503, %v495
      %v540 = vpack.c.bf16 %v504, %v496
      %v541 = vpack.c.bf16 %v511, %v471
      %v542 = vpack.c.bf16 %v512, %v472
      %v543 = vpack.c.bf16 %v527, %v519
      %v544 = vpack.c.bf16 %v528, %v520
      %v545 = vpack.c.bf16 %v535, %v535
      %v546 = vpack.c.bf16 %v536, %v536
      %v547 = vld [vmem:[%s2] sm:$0xf]
      %v549 = vsel %vm419, %v547, 0
      %v552 = vsel %vm423, %v545, 0
      %v555 = vsel %vm423, %v546, 0
      %557 = vmatprep.subr.bf16.mxu0 0
      %558 = vmatpush1.bf16.msra.mxu0 0
      %559 = vmatprep.subr.bf16.mxu0 0
      %560 = vmatpush1.bf16.msra.mxu0 0
      %561 = vmatprep.subr.bf16.mxu0 0
      %562 = vmatpush1.bf16.msra.mxu0 0
      %563 = vmatprep.subr.bf16.mxu0 %v555
      %564 = vmatpush1.bf16.msra.mxu0 %v552
      %565 = vmatprep.subr.bf16.mxu0 %v544
      %566 = vmatpush1.bf16.msra.mxu0 %v543
      %567 = vmatprep.subr.bf16.mxu0 %v542
      %568 = vmatpush1.bf16.msra.mxu0 %v541
      %569 = vmatprep.subr.bf16.mxu0 %v540
      %570 = vmatpush1.bf16.msra.mxu0 %v539
      %571 = vmatprep.subr.bf16.mxu0 %v538
      %572 = vmatpush1.bf16.msra.mxu0 %v537
      %573 = vmatprep.subr.bf16.mxu0 0
      %574 = vmatpush2.bf16.msra.mxu0 0
      %575 = vmatprep.subr.bf16.mxu0 0
      %576 = vmatpush2.bf16.msra.mxu0 0
      %577 = vmatprep.subr.bf16.mxu0 0
      %578 = vmatpush2.bf16.msra.mxu0 0
      %579 = vmatprep.subr.bf16.mxu0 0
      %580 = vmatpush2.bf16.msra.mxu0 0
      %581 = vmatprep.subr.bf16.mxu0 0
      %582 = vmatpush2.bf16.msra.mxu0 0
      %583 = vmatprep.subr.bf16.mxu0 0
      %584 = vmatpush2.bf16.msra.mxu0 0
      %585 = vmatprep.subr.bf16.mxu0 0
      %586 = vmatpush2.bf16.msra.mxu0 0
      %587 = vmatprep.subr.bf16.mxu0 0
      %588 = vmatpush2.bf16.msra.mxu0 0
      %589 = vmatprep.mubr.bf16.mxu0 0
      %590 = vmatmul.mubr.bf16.gmra.mxu0 %v549
      %v591 = vpop.f32.mrf.mxu0
      %v592 = vadd.f32 0.0, %v591
      %v593 = vpop.f32.mrf.mxu0
      %v594 = vadd.f32 0.0, %v593
      %v595 = vpop.f32.mrf.mxu0
      %v596 = vpop.f32.mrf.mxu0
      %597 = vdwg.mxu0
      %v598 = vmax.f32 %v592, 0.0
      %v599 = vmax.f32 %v594, 0.0
      %600 = vst [vmem:[%s258] sm:$0xff] %v598
      %601 = vst [vmem:[%s258 + $0x8] sm:$0xff] %v599
      %602 = vrot.lane.b32.xlu0 %v598, 112
      %v603 = vpop.permute.xlu0 %602
      %604 = vrot.lane.b32.xlu0 %v599, 112
      %v605 = vpop.permute.xlu0 %604
      %v606 = vsel %vm378, %v603, %v605
      %v607 = vsel %vm378, %v605, %v603
      %v608 = vmax.f32 %v598, %v606
      %v609 = vmax.f32 %v599, %v607
      %610 = vrot.lane.b32.xlu0 %v608, 127
      %v611 = vpop.permute.xlu0 %610
      %612 = vrot.lane.b32.xlu0 %v609, 127
      %v613 = vpop.permute.xlu0 %612
      %v614 = vsel %vm344, %v611, %v613
      %v615 = vsel %vm344, %v613, %v611
      %v616 = vmax.f32 %v608, %v614
      %v617 = vmax.f32 %v609, %v615
      %v618 = vld [vmem:[%s4] sm:$0xff]
      %v619 = vld [vmem:[%s4 + $0x8] sm:$0xff]
      %v620 = vld [vmem:[%s4 + $0x10] sm:$0xff]
      %v621 = vld [vmem:[%s4 + $0x18] sm:$0xff]
      %v622 = vld [vmem:[%s4 + $0x20] sm:$0xff]
      %v623 = vld [vmem:[%s4 + $0x28] sm:$0xff]
      %v624 = vld [vmem:[%s4 + $0x30] sm:$0xff]
      %v625 = vld [vmem:[%s4 + $0x38] sm:$0xff]
      %v626 = vld [vmem:[%s4 + $0x40] sm:$0xff]
      %v627 = vld [vmem:[%s4 + $0x48] sm:$0xff]
      %v628 = vld [vmem:[%s4 + $0x50] sm:$0xff]
      %v629 = vld [vmem:[%s4 + $0x58] sm:$0xff]
      %v630 = vld [vmem:[%s4 + $0x60] sm:$0xff]
      %v631 = vld [vmem:[%s4 + $0x68] sm:$0xff]
      %v632 = vld [vmem:[%s4 + $0x70] sm:$0xff]
      %v633 = vld [vmem:[%s4 + $0x78] sm:$0xff]
      %v634 = vld [vmem:[%s4 + $0x80] sm:$0xff]
      %v635 = vld [vmem:[%s4 + $0x88] sm:$0xff]
      %v636 = vld [vmem:[%s4 + $0x90] sm:$0xff]
      %v637 = vld [vmem:[%s4 + $0x98] sm:$0xff]
      %v638 = vld [vmem:[%s4 + $0xa0] sm:$0xff]
      %v639 = vld [vmem:[%s4 + $0xa8] sm:$0xff]
      %v640 = vld [vmem:[%s4 + $0xb0] sm:$0xff]
      %v641 = vld [vmem:[%s4 + $0xb8] sm:$0xff]
      %v642 = vld [vmem:[%s4 + $0xc0] sm:$0xff]
      %v643 = vld [vmem:[%s4 + $0xc8] sm:$0xff]
      %v644 = vld [vmem:[%s4 + $0xd0] sm:$0xff]
      %v645 = vld [vmem:[%s4 + $0xd8] sm:$0xff]
      %v646 = vld [vmem:[%s4 + $0xe0] sm:$0xff]
      %v647 = vld [vmem:[%s4 + $0xe8] sm:$0xff]
      %v648 = vld [vmem:[%s4 + $0xf0] sm:$0xff]
      %v649 = vld [vmem:[%s4 + $0xf8] sm:$0xff]
      %650 = vmatprep.subr.mxu0 0.0
      %651 = vmatpush1.msra.mxu0 %v633
      %652 = vmatprep.subr.mxu0 0.0
      %653 = vmatpush1.msra.mxu0 %v632
      %654 = vmatprep.subr.mxu0 0.0
      %655 = vmatpush1.msra.mxu0 %v631
      %656 = vmatprep.subr.mxu0 0.0
      %657 = vmatpush1.msra.mxu0 %v630
      %658 = vmatprep.subr.mxu0 0.0
      %659 = vmatpush1.msra.mxu0 %v629
      %660 = vmatprep.subr.mxu0 0.0
      %661 = vmatpush1.msra.mxu0 %v628
      %662 = vmatprep.subr.mxu0 0.0
      %663 = vmatpush1.msra.mxu0 %v627
      %664 = vmatprep.subr.mxu0 0.0
      %665 = vmatpush1.msra.mxu0 %v626
      %666 = vmatprep.subr.mxu0 0.0
      %667 = vmatpush1.msra.mxu0 %v625
      %668 = vmatprep.subr.mxu0 0.0
      %669 = vmatpush1.msra.mxu0 %v624
      %670 = vmatprep.subr.mxu0 0.0
      %671 = vmatpush1.msra.mxu0 %v623
      %672 = vmatprep.subr.mxu0 0.0
      %673 = vmatpush1.msra.mxu0 %v622
      %674 = vmatprep.subr.mxu0 0.0
      %675 = vmatpush1.msra.mxu0 %v621
      %676 = vmatprep.subr.mxu0 0.0
      %677 = vmatpush1.msra.mxu0 %v620
      %678 = vmatprep.subr.mxu0 0.0
      %679 = vmatpush1.msra.mxu0 %v619
      %680 = vmatprep.subr.mxu0 0.0
      %681 = vmatpush1.msra.mxu0 %v618
      %682 = vmatprep.subr.mxu0 0.0
      %683 = vmatpush2.msra.mxu0 %v649
      %684 = vmatprep.subr.mxu0 0.0
      %685 = vmatpush2.msra.mxu0 %v648
      %686 = vmatprep.subr.mxu0 0.0
      %687 = vmatpush2.msra.mxu0 %v647
      %688 = vmatprep.subr.mxu0 0.0
      %689 = vmatpush2.msra.mxu0 %v646
      %690 = vmatprep.subr.mxu0 0.0
      %691 = vmatpush2.msra.mxu0 %v645
      %692 = vmatprep.subr.mxu0 0.0
      %693 = vmatpush2.msra.mxu0 %v644
      %694 = vmatprep.subr.mxu0 0.0
      %695 = vmatpush2.msra.mxu0 %v643
      %696 = vmatprep.subr.mxu0 0.0
      %697 = vmatpush2.msra.mxu0 %v642
      %698 = vmatprep.subr.mxu0 0.0
      %699 = vmatpush2.msra.mxu0 %v641
      %700 = vmatprep.subr.mxu0 0.0
      %701 = vmatpush2.msra.mxu0 %v640
      %702 = vmatprep.subr.mxu0 0.0
      %703 = vmatpush2.msra.mxu0 %v639
      %704 = vmatprep.subr.mxu0 0.0
      %705 = vmatpush2.msra.mxu0 %v638
      %706 = vmatprep.subr.mxu0 0.0
      %707 = vmatpush2.msra.mxu0 %v637
      %708 = vmatprep.subr.mxu0 0.0
      %709 = vmatpush2.msra.mxu0 %v636
      %710 = vmatprep.subr.mxu0 0.0
      %711 = vmatpush2.msra.mxu0 %v635
      %712 = vmatprep.subr.mxu0 0.0
      %713 = vmatpush2.msra.mxu0 %v634
      %714 = vmatprep.mubr.f32.mxu0 %v617
      %715 = vmatmul.mubr.f32.gmra.mxu0 %v616
      %v716 = vpop.f32.mrf.mxu0
      %v717 = vadd.f32 0.0, %v716
      %v718 = vpop.f32.mrf.mxu0
      %719 = vdwg.mxu0
      %720 = vst [vmem:[%s262] sm:$0xff] %v717
      %p721 = scmp.lt.s32.totalorder %s18, 1
      %s722 = scalar_select %p721, %s18, 1
      %s723 = smul.addr %s722, 2
      %s724 = smul.addr %s723, 8
      %s725 = scalar_lea.vmem %s5, %s724
      %p726 = scmp.lt.s32.totalorder %s18, 1
      %s727 = scalar_select %p726, %s18, 1
      %s728 = smul.addr %s727, 8
      %s729 = scalar_lea.vmem %s6, %s728
      // Predicated region
      $region41: #{stack_encoder_forward.1} parent=39 // pred_check
        %p730 = pneg %p146
      $region42: #{stack_encoder_forward.1} parent=39 // pred_check_branch
        %732 = sbr.rel (%p730) target = $region44
      $region43: #{stack_encoder_forward.1} parent=39 // pred_region
        _
      $region44: #{stack_encoder_forward.1} parent=39 // pred_fallthru
        _
      // Predicated region
      $region45: #{stack_encoder_forward.1} parent=39 // pred_check
        %p733 = pneg %p172
      $region46: #{stack_encoder_forward.1} parent=39 // pred_check_branch
        %735 = sbr.rel (%p733) target = $region48
      $region47: #{stack_encoder_forward.1} parent=39 // pred_region
        _
      $region48: #{stack_encoder_forward.1} parent=39 // pred_fallthru
        _
    $region40: #{stack_encoder_forward.1} parent=5 // pred_fallthru
      _
    %p736 = scmp.le.s32.totalorder 2, %s13
    // Predicated region
    $region49: #{stack_encoder_forward.1} parent=5 // pred_check
      %p737 = pneg %p736
    $region50: #{stack_encoder_forward.1} parent=5 // pred_check_branch
      %739 = sbr.rel (%p737) target = $region52
    $region51: #{stack_encoder_forward.1} parent=5 // pred_region
      %s740 = ssub.s32 %s13, 2
      // Predicated region
      $region53: #{stack_encoder_forward.1} parent=51 // pred_check
        %p741 = pneg %p152
      $region54: #{stack_encoder_forward.1} parent=51 // pred_check_branch
        %743 = sbr.rel (%p741) target = $region56
      $region55: #{stack_encoder_forward.1} parent=51 // pred_region
        %p744 = scmp.lt.s32.totalorder %s19, 1
        %s745 = scalar_select %p744, %s19, 1
        %s746 = smul.addr %s745, 2
        %s747 = smul.addr %s746, 8
        %s748 = scalar_lea.vmem %s5, %s747
      $region56: #{stack_encoder_forward.1} parent=51 // pred_fallthru
        _
      // Predicated region
      $region57: #{stack_encoder_forward.1} parent=51 // pred_check
        %p749 = pneg %p178
      $region58: #{stack_encoder_forward.1} parent=51 // pred_check_branch
        %751 = sbr.rel (%p749) target = $region60
      $region59: #{stack_encoder_forward.1} parent=51 // pred_region
        %p752 = scmp.lt.s32.totalorder %s19, 1
        %s753 = scalar_select %p752, %s19, 1
        %s754 = smul.addr %s753, 8
        %s755 = scalar_lea.vmem %s6, %s754
      $region60: #{stack_encoder_forward.1} parent=51 // pred_fallthru
        _
    $region52: #{stack_encoder_forward.1} parent=5 // pred_fallthru
      _
  $region6: #{stack_encoder_forward.1} parent=0 // loop_footer
    %s17 = sadd.s32 1, %s13
  $region7: #{stack_encoder_forward.1} parent=0 // loop_footer_branch
    %12 = sbr.rel target = $region3
  $region8: #{stack_encoder_forward.1} parent=0 // loop_exit
    _

</llo_original>
